<compile_context>
chip_gen: v6e
topology: v6e:2x2x1
jax: 0.10.0
libtpu: 0.0.40
codegen_flags: <defaults>
</compile_context>

<pallas_src>
import functools
import math

import jax
import jax.numpy as jnp
from jax.experimental import pallas as pl
from jax.experimental.pallas import tpu as pltpu

# ----------------------------- configuration ------------------------------
GRID_MIN = -2.0
GRID_MAX = 2.0
NUM_GRIDS = 8
DENOM = (GRID_MAX - GRID_MIN) / (NUM_GRIDS - 1)
GRID_VALS = tuple(
    GRID_MIN + (GRID_MAX - GRID_MIN) * k / (NUM_GRIDS - 1) for k in range(NUM_GRIDS)
)
SPLINE_INIT_SCALE = 0.1
USE_BASE_UPDATE = True

_LANE = 128
_SUBLANE = 8


# ------------------------------- kernel -----------------------------------
def _kan_kernel(x_ref, ws_ref, wb_ref, bb_ref, o_ref):
    """One (row-tile, output-column-tile) of the KAN forward.

    x_ref  : (TM, H)     input rows (original dtype)
    ws_ref : (G*H, TO)   fused spline weight, ws[g*H + h, o] = W_spline[o, h*G + g]
    wb_ref : (H, TO)     base linear weight (transposed vs. PyTorch)
    bb_ref : (1, TO)     base linear bias (f32)
    o_ref  : (TM, TO)    output rows
    """
    x = x_ref[...].astype(jnp.float32)                     # (TM, H)
    tm, H = x.shape
    to = o_ref.shape[1]
    mm_dtype = ws_ref.dtype                                 # bf16 MXU operands
    inv_denom = jnp.float32(1.0 / DENOM)

    # RBF basis, computed in f32 on the VPU/EUP, fed to the MXU in bf16.
    phis = []
    for g in range(NUM_GRIDS):
        z = (x - jnp.float32(GRID_VALS[g])) * inv_denom
        phis.append(jnp.exp(-(z * z)).astype(mm_dtype))     # (TM, H)

    if H % _LANE == 0:
        # Lane-aligned: fuse the G contractions into one K = G*H matmul
        # (accumulation happens inside the MXU instead of 8 VALU adds).
        phi = jnp.concatenate(phis, axis=-1)                # (TM, G*H)
        acc = jnp.dot(phi, ws_ref[...], preferred_element_type=jnp.float32)
    else:
        # Small / unaligned H: per-grid-point matmuls against sublane-aligned
        # slices of the fused weight (offsets are multiples of H).
        acc = jnp.zeros((tm, to), jnp.float32)
        for g in range(NUM_GRIDS):
            acc += jnp.dot(phis[g], ws_ref[g * H:(g + 1) * H, :],
                           preferred_element_type=jnp.float32)

    if USE_BASE_UPDATE:
        base_act = (x * jax.nn.sigmoid(x)).astype(mm_dtype)  # SiLU in f32, cast
        acc += jnp.dot(base_act, wb_ref[...], preferred_element_type=jnp.float32)
        acc += bb_ref[...]                                   # one broadcast+add per tile

    o_ref[...] = acc.astype(o_ref.dtype)


# --------------------------- parameter repacking ----------------------------
def prepare_kan_params(w_spline, w_base, b_base, *, weight_dtype=jnp.bfloat16):
    """One-time repack of PyTorch-layout parameters (call at load time, not per step).

    w_spline : (O, H*G) with flat index h*G + g   (SplineLinear.weight)
    w_base   : (O, H)
    b_base   : (O,)
    Returns:
      ws : (G*H, O)  ws[g*H + h, o] = w_spline[o, h*G + g]   (fused-K layout, bf16)
      wb : (H, O)                                            (bf16)
      bb : (1, O)                                            (f32)
    """
    O, HG = w_spline.shape
    H = HG // NUM_GRIDS
    ws = (w_spline.reshape(O, H, NUM_GRIDS)
          .transpose(2, 1, 0)
          .reshape(NUM_GRIDS * H, O)
          .astype(weight_dtype))
    wb = w_base.T.astype(weight_dtype)
    bb = b_base.reshape(1, O).astype(jnp.float32)
    return ws, wb, bb


# ------------------------------- wrapper -----------------------------------
def _round_up(n, m):
    return ((n + m - 1) // m) * m


def _choose_col_tile(H, O, weight_bytes, budget_bytes=24 << 20):
    """Largest lane-aligned output-column tile whose double-buffered weight
    slices stay within `budget_bytes` of VMEM (v7x has only 64 MiB total)."""
    if O <= 512:
        return O
    per_col = 2 * (NUM_GRIDS * H + H) * weight_bytes        # 2 pipeline buffers
    for tn in (512, 256, 128):
        if O % tn == 0 and per_col * tn <= budget_bytes:
            return tn
    for tn in (512, 256, 128):
        if O % tn == 0:
            return tn
    return O                                                # no aligned divisor


@functools.partial(jax.jit, static_argnames=("tile_rows",))
def kan_forward(x, ws, wb, bb, *, tile_rows=256):
    """x: (..., H). ws/wb/bb from prepare_kan_params. Returns (..., O)."""
    orig_shape = x.shape
    H = orig_shape[-1]
    GH, O = ws.shape
    assert GH == NUM_GRIDS * H

    x2 = x.reshape(-1, H)
    N = x2.shape[0]

    # Row tile: multiple of 8, at most `tile_rows`; pad N up to a multiple.
    tm = _round_up(min(tile_rows, _round_up(N, _SUBLANE)), _SUBLANE)
    Np = _round_up(N, tm)
    if Np != N:
        x2 = jnp.pad(x2, ((0, Np - N), (0, 0)))

    w_bytes = jnp.dtype(ws.dtype).itemsize
    x_bytes = jnp.dtype(x.dtype).itemsize
    tn = _choose_col_tile(H, O, w_bytes)

    n_rows = Np // tm
    n_cols = O // tn

    # VMEM budget: double-buffered operands + phi / accumulator intermediates.
    need = (2 * tm * H * x_bytes
            + 2 * (GH * tn + H * tn) * w_bytes + 2 * tn * 4
            + 2 * tm * tn * x_bytes
            + tm * GH * (w_bytes + 4)
            + tm * tn * 4)
    vmem_limit = int(min(max(2 * need, 32 << 20), 64 << 20))

    n_mm = NUM_GRIDS + (1 if USE_BASE_UPDATE else 0)
    cost = pl.CostEstimate(
        flops=2 * Np * O * H * n_mm,
        transcendentals=n_mm * Np * H,
        bytes_accessed=Np * H * x_bytes + (GH + H) * O * w_bytes + O * 4
                       + Np * O * x_bytes,
    )

    # Grid: (output-column tiles, row tiles).  Rows are the inner (fastest)
    # axis so the weight block index is constant across it -> weights are
    # DMA'd only n_cols times total while x rows stream through.
    out = pl.pallas_call(
        _kan_kernel,
        out_shape=jax.ShapeDtypeStruct((Np, O), x.dtype),
        grid_spec=pltpu.PrefetchScalarGridSpec(
            num_scalar_prefetch=0,
            grid=(n_cols, n_rows),
            in_specs=[
                pl.BlockSpec((tm, H), lambda j, i: (i, 0)),
                pl.BlockSpec((GH, tn), lambda j, i: (0, j)),
                pl.BlockSpec((H, tn), lambda j, i: (0, j)),
                pl.BlockSpec((1, tn), lambda j, i: (0, j)),
            ],
            out_specs=pl.BlockSpec((tm, tn), lambda j, i: (i, j)),
        ),
        compiler_params=pltpu.CompilerParams(
            dimension_semantics=("parallel", "parallel"),
            vmem_limit_bytes=vmem_limit,
        ),
        cost_estimate=cost,
    )(x2, ws, wb, bb)

    if Np != N:
        out = out[:N]
    return out.reshape(*orig_shape[:-1], O)


# --------------------------- reference (plain JAX) --------------------------
def kan_reference(x, w_spline, w_base, b_base, *, quantize_dtype=None):
    """Reference forward.  If quantize_dtype is set, matmul operands are rounded
    to that dtype to mirror the bf16 kernel (accumulation stays f32)."""
    def q(a):
        a = a.astype(jnp.float32)
        if quantize_dtype is not None:
            a = a.astype(quantize_dtype).astype(jnp.float32)
        return a

    grid = jnp.asarray(GRID_VALS, jnp.float32)
    xf = x.astype(jnp.float32)
    basis = jnp.exp(-(((xf[..., None] - grid) / DENOM) ** 2))      # (..., H, G)
    flat = q(basis.reshape(*basis.shape[:-2], -1))                 # (..., H*G)
    ret = flat @ q(w_spline).T
    if USE_BASE_UPDATE:
        ret = ret + q(jax.nn.silu(xf)) @ q(w_base).T + b_base.astype(jnp.float32)
    return ret.astype(x.dtype)


# ---------------------------------- main ------------------------------------
def _run_case(key, batch, seq, hidden):
    k_x, k_ws, k_wb, k_bb = jax.random.split(key, 4)
    x = jax.random.normal(k_x, (batch, seq, hidden), jnp.float32)

    # SplineLinear: trunc_normal(std=0.1), shape (out, in*num_grids), no bias.
    w_spline = (
        jax.random.truncated_normal(k_ws, -2.0, 2.0, (hidden, hidden * NUM_GRIDS))
        * SPLINE_INIT_SCALE
    ).astype(jnp.float32)

    # Base nn.Linear default init.
    bound = 1.0 / math.sqrt(hidden)
    w_base = jax.random.uniform(k_wb, (hidden, hidden), jnp.float32, -bound, bound)
    b_base = jax.random.uniform(k_bb, (hidden,), jnp.float32, -bound, bound)

    ws, wb, bb = prepare_kan_params(w_spline, w_base, b_base)      # once, offline
    out = jax.block_until_ready(kan_forward(x, ws, wb, bb))

    ref = kan_reference(x, w_spline, w_base, b_base, quantize_dtype=jnp.bfloat16)
    assert out.shape == (batch, seq, hidden)
    err = float(jnp.max(jnp.abs(out - ref)))
    assert jnp.allclose(out, ref, atol=2e-2, rtol=2e-2), (hidden, err)


if __name__ == "__main__":
    key = jax.random.PRNGKey(0)
    k1, k2 = jax.random.split(key)
    # Small hidden (unaligned): exercises the per-grid-point fallback path.
    _run_case(k1, batch=2, seq=8, hidden=32)
    # Lane-aligned hidden: exercises the fused single-matmul (K = G*H) path.
    _run_case(k2, batch=2, seq=8, hidden=128)
    print("KERNEL_OK")
</pallas_src>

<mosaic_0001>
module attributes {stable_mosaic.version = 11 : i64} {
  func.func @_kan_kernel(%arg0: i32, %arg1: i32, %arg2: memref<16x32xf32, #tpu.memory_space<vmem>>, %arg3: memref<256x32xbf16, #tpu.memory_space<vmem>>, %arg4: memref<32x32xbf16, #tpu.memory_space<vmem>>, %arg5: memref<1x32xf32, #tpu.memory_space<vmem>>, %arg6: memref<16x32xf32, #tpu.memory_space<vmem>>) attributes {dimension_semantics = [#tpu.dimension_semantics<parallel>, #tpu.dimension_semantics<parallel>], iteration_bounds = array<i64: 1, 1>, scalar_prefetch = 0 : i64, scratch_operands = 0 : i64, tpu.core_type = #tpu.core_type<tc>, window_params = [{transform_indices = @transform_0, window_bounds = array<i64: 16, 32>}, {transform_indices = @transform_1, window_bounds = array<i64: 256, 32>}, {transform_indices = @transform_2, window_bounds = array<i64: 32, 32>}, {transform_indices = @transform_3, window_bounds = array<i64: 1, 32>}, {transform_indices = @transform_4, window_bounds = array<i64: 16, 32>}]} {
    %c0 = arith.constant 0 : index
    %c0_0 = arith.constant 0 : index
    %0 = vector.load %arg2[%c0, %c0_0] : memref<16x32xf32, #tpu.memory_space<vmem>>, vector<16x32xf32>
    %cst = arith.constant -2.000000e+00 : f32
    %1 = vector.broadcast %cst : f32 to vector<16x32xf32>
    %2 = arith.subf %0, %1 : vector<16x32xf32>
    %cst_1 = arith.constant 1.750000e+00 : f32
    %3 = vector.broadcast %cst_1 : f32 to vector<16x32xf32>
    %4 = arith.mulf %2, %3 : vector<16x32xf32>
    %5 = arith.mulf %4, %4 : vector<16x32xf32>
    %cst_2 = arith.constant 0.000000e+00 : f32
    %6 = vector.broadcast %cst_2 : f32 to vector<16x32xf32>
    %7 = arith.subf %6, %5 : vector<16x32xf32>
    %8 = math.exp %7 : vector<16x32xf32>
    %9 = arith.truncf %8 : vector<16x32xf32> to vector<16x32xbf16>
    %cst_3 = arith.constant -1.42857146 : f32
    %10 = vector.broadcast %cst_3 : f32 to vector<16x32xf32>
    %11 = arith.subf %0, %10 : vector<16x32xf32>
    %cst_4 = arith.constant 1.750000e+00 : f32
    %12 = vector.broadcast %cst_4 : f32 to vector<16x32xf32>
    %13 = arith.mulf %11, %12 : vector<16x32xf32>
    %14 = arith.mulf %13, %13 : vector<16x32xf32>
    %cst_5 = arith.constant 0.000000e+00 : f32
    %15 = vector.broadcast %cst_5 : f32 to vector<16x32xf32>
    %16 = arith.subf %15, %14 : vector<16x32xf32>
    %17 = math.exp %16 : vector<16x32xf32>
    %18 = arith.truncf %17 : vector<16x32xf32> to vector<16x32xbf16>
    %cst_6 = arith.constant -0.857142865 : f32
    %19 = vector.broadcast %cst_6 : f32 to vector<16x32xf32>
    %20 = arith.subf %0, %19 : vector<16x32xf32>
    %cst_7 = arith.constant 1.750000e+00 : f32
    %21 = vector.broadcast %cst_7 : f32 to vector<16x32xf32>
    %22 = arith.mulf %20, %21 : vector<16x32xf32>
    %23 = arith.mulf %22, %22 : vector<16x32xf32>
    %cst_8 = arith.constant 0.000000e+00 : f32
    %24 = vector.broadcast %cst_8 : f32 to vector<16x32xf32>
    %25 = arith.subf %24, %23 : vector<16x32xf32>
    %26 = math.exp %25 : vector<16x32xf32>
    %27 = arith.truncf %26 : vector<16x32xf32> to vector<16x32xbf16>
    %cst_9 = arith.constant -0.285714298 : f32
    %28 = vector.broadcast %cst_9 : f32 to vector<16x32xf32>
    %29 = arith.subf %0, %28 : vector<16x32xf32>
    %cst_10 = arith.constant 1.750000e+00 : f32
    %30 = vector.broadcast %cst_10 : f32 to vector<16x32xf32>
    %31 = arith.mulf %29, %30 : vector<16x32xf32>
    %32 = arith.mulf %31, %31 : vector<16x32xf32>
    %cst_11 = arith.constant 0.000000e+00 : f32
    %33 = vector.broadcast %cst_11 : f32 to vector<16x32xf32>
    %34 = arith.subf %33, %32 : vector<16x32xf32>
    %35 = math.exp %34 : vector<16x32xf32>
    %36 = arith.truncf %35 : vector<16x32xf32> to vector<16x32xbf16>
    %cst_12 = arith.constant 0.285714298 : f32
    %37 = vector.broadcast %cst_12 : f32 to vector<16x32xf32>
    %38 = arith.subf %0, %37 : vector<16x32xf32>
    %cst_13 = arith.constant 1.750000e+00 : f32
    %39 = vector.broadcast %cst_13 : f32 to vector<16x32xf32>
    %40 = arith.mulf %38, %39 : vector<16x32xf32>
    %41 = arith.mulf %40, %40 : vector<16x32xf32>
    %cst_14 = arith.constant 0.000000e+00 : f32
    %42 = vector.broadcast %cst_14 : f32 to vector<16x32xf32>
    %43 = arith.subf %42, %41 : vector<16x32xf32>
    %44 = math.exp %43 : vector<16x32xf32>
    %45 = arith.truncf %44 : vector<16x32xf32> to vector<16x32xbf16>
    %cst_15 = arith.constant 0.857142865 : f32
    %46 = vector.broadcast %cst_15 : f32 to vector<16x32xf32>
    %47 = arith.subf %0, %46 : vector<16x32xf32>
    %cst_16 = arith.constant 1.750000e+00 : f32
    %48 = vector.broadcast %cst_16 : f32 to vector<16x32xf32>
    %49 = arith.mulf %47, %48 : vector<16x32xf32>
    %50 = arith.mulf %49, %49 : vector<16x32xf32>
    %cst_17 = arith.constant 0.000000e+00 : f32
    %51 = vector.broadcast %cst_17 : f32 to vector<16x32xf32>
    %52 = arith.subf %51, %50 : vector<16x32xf32>
    %53 = math.exp %52 : vector<16x32xf32>
    %54 = arith.truncf %53 : vector<16x32xf32> to vector<16x32xbf16>
    %cst_18 = arith.constant 1.42857146 : f32
    %55 = vector.broadcast %cst_18 : f32 to vector<16x32xf32>
    %56 = arith.subf %0, %55 : vector<16x32xf32>
    %cst_19 = arith.constant 1.750000e+00 : f32
    %57 = vector.broadcast %cst_19 : f32 to vector<16x32xf32>
    %58 = arith.mulf %56, %57 : vector<16x32xf32>
    %59 = arith.mulf %58, %58 : vector<16x32xf32>
    %cst_20 = arith.constant 0.000000e+00 : f32
    %60 = vector.broadcast %cst_20 : f32 to vector<16x32xf32>
    %61 = arith.subf %60, %59 : vector<16x32xf32>
    %62 = math.exp %61 : vector<16x32xf32>
    %63 = arith.truncf %62 : vector<16x32xf32> to vector<16x32xbf16>
    %cst_21 = arith.constant 2.000000e+00 : f32
    %64 = vector.broadcast %cst_21 : f32 to vector<16x32xf32>
    %65 = arith.subf %0, %64 : vector<16x32xf32>
    %cst_22 = arith.constant 1.750000e+00 : f32
    %66 = vector.broadcast %cst_22 : f32 to vector<16x32xf32>
    %67 = arith.mulf %65, %66 : vector<16x32xf32>
    %68 = arith.mulf %67, %67 : vector<16x32xf32>
    %cst_23 = arith.constant 0.000000e+00 : f32
    %69 = vector.broadcast %cst_23 : f32 to vector<16x32xf32>
    %70 = arith.subf %69, %68 : vector<16x32xf32>
    %71 = math.exp %70 : vector<16x32xf32>
    %72 = arith.truncf %71 : vector<16x32xf32> to vector<16x32xbf16>
    %cst_24 = arith.constant 0.000000e+00 : f32
    %73 = vector.broadcast %cst_24 : f32 to vector<16x32xf32>
    %c0_25 = arith.constant 0 : index
    %c0_26 = arith.constant 0 : index
    %74 = vector.load %arg3[%c0_25, %c0_26] : memref<256x32xbf16, #tpu.memory_space<vmem>>, vector<32x32xbf16>
    %cst_27 = arith.constant dense<0.000000e+00> : vector<16x32xf32>
    %75 = tpu.matmul %9, %74, %cst_27 {dimension_numbers = #tpu.dot_dimension_numbers<[1], [0], [0], [1], [0, 0, 1, 1], [], []>} : vector<16x32xbf16>, vector<32x32xbf16>, vector<16x32xf32> -> vector<16x32xf32>
    %76 = arith.addf %73, %75 : vector<16x32xf32>
    %c32 = arith.constant 32 : index
    %c0_28 = arith.constant 0 : index
    %77 = vector.load %arg3[%c32, %c0_28] : memref<256x32xbf16, #tpu.memory_space<vmem>>, vector<32x32xbf16>
    %cst_29 = arith.constant dense<0.000000e+00> : vector<16x32xf32>
    %78 = tpu.matmul %18, %77, %cst_29 {dimension_numbers = #tpu.dot_dimension_numbers<[1], [0], [0], [1], [0, 0, 1, 1], [], []>} : vector<16x32xbf16>, vector<32x32xbf16>, vector<16x32xf32> -> vector<16x32xf32>
    %79 = arith.addf %76, %78 : vector<16x32xf32>
    %c64 = arith.constant 64 : index
    %c0_30 = arith.constant 0 : index
    %80 = vector.load %arg3[%c64, %c0_30] : memref<256x32xbf16, #tpu.memory_space<vmem>>, vector<32x32xbf16>
    %cst_31 = arith.constant dense<0.000000e+00> : vector<16x32xf32>
    %81 = tpu.matmul %27, %80, %cst_31 {dimension_numbers = #tpu.dot_dimension_numbers<[1], [0], [0], [1], [0, 0, 1, 1], [], []>} : vector<16x32xbf16>, vector<32x32xbf16>, vector<16x32xf32> -> vector<16x32xf32>
    %82 = arith.addf %79, %81 : vector<16x32xf32>
    %c96 = arith.constant 96 : index
    %c0_32 = arith.constant 0 : index
    %83 = vector.load %arg3[%c96, %c0_32] : memref<256x32xbf16, #tpu.memory_space<vmem>>, vector<32x32xbf16>
    %cst_33 = arith.constant dense<0.000000e+00> : vector<16x32xf32>
    %84 = tpu.matmul %36, %83, %cst_33 {dimension_numbers = #tpu.dot_dimension_numbers<[1], [0], [0], [1], [0, 0, 1, 1], [], []>} : vector<16x32xbf16>, vector<32x32xbf16>, vector<16x32xf32> -> vector<16x32xf32>
    %85 = arith.addf %82, %84 : vector<16x32xf32>
    %c128 = arith.constant 128 : index
    %c0_34 = arith.constant 0 : index
    %86 = vector.load %arg3[%c128, %c0_34] : memref<256x32xbf16, #tpu.memory_space<vmem>>, vector<32x32xbf16>
    %cst_35 = arith.constant dense<0.000000e+00> : vector<16x32xf32>
    %87 = tpu.matmul %45, %86, %cst_35 {dimension_numbers = #tpu.dot_dimension_numbers<[1], [0], [0], [1], [0, 0, 1, 1], [], []>} : vector<16x32xbf16>, vector<32x32xbf16>, vector<16x32xf32> -> vector<16x32xf32>
    %88 = arith.addf %85, %87 : vector<16x32xf32>
    %c160 = arith.constant 160 : index
    %c0_36 = arith.constant 0 : index
    %89 = vector.load %arg3[%c160, %c0_36] : memref<256x32xbf16, #tpu.memory_space<vmem>>, vector<32x32xbf16>
    %cst_37 = arith.constant dense<0.000000e+00> : vector<16x32xf32>
    %90 = tpu.matmul %54, %89, %cst_37 {dimension_numbers = #tpu.dot_dimension_numbers<[1], [0], [0], [1], [0, 0, 1, 1], [], []>} : vector<16x32xbf16>, vector<32x32xbf16>, vector<16x32xf32> -> vector<16x32xf32>
    %91 = arith.addf %88, %90 : vector<16x32xf32>
    %c192 = arith.constant 192 : index
    %c0_38 = arith.constant 0 : index
    %92 = vector.load %arg3[%c192, %c0_38] : memref<256x32xbf16, #tpu.memory_space<vmem>>, vector<32x32xbf16>
    %cst_39 = arith.constant dense<0.000000e+00> : vector<16x32xf32>
    %93 = tpu.matmul %63, %92, %cst_39 {dimension_numbers = #tpu.dot_dimension_numbers<[1], [0], [0], [1], [0, 0, 1, 1], [], []>} : vector<16x32xbf16>, vector<32x32xbf16>, vector<16x32xf32> -> vector<16x32xf32>
    %94 = arith.addf %91, %93 : vector<16x32xf32>
    %c224 = arith.constant 224 : index
    %c0_40 = arith.constant 0 : index
    %95 = vector.load %arg3[%c224, %c0_40] : memref<256x32xbf16, #tpu.memory_space<vmem>>, vector<32x32xbf16>
    %cst_41 = arith.constant dense<0.000000e+00> : vector<16x32xf32>
    %96 = tpu.matmul %72, %95, %cst_41 {dimension_numbers = #tpu.dot_dimension_numbers<[1], [0], [0], [1], [0, 0, 1, 1], [], []>} : vector<16x32xbf16>, vector<32x32xbf16>, vector<16x32xf32> -> vector<16x32xf32>
    %97 = arith.addf %94, %96 : vector<16x32xf32>
    %98 = arith.negf %0 : vector<16x32xf32>
    %99 = math.exp %98 : vector<16x32xf32>
    %cst_42 = arith.constant 1.000000e+00 : f32
    %100 = vector.broadcast %cst_42 : f32 to vector<16x32xf32>
    %101 = arith.addf %100, %99 : vector<16x32xf32>
    %102 = arith.divf %100, %101 : vector<16x32xf32>
    %103 = arith.mulf %0, %102 : vector<16x32xf32>
    %104 = arith.truncf %103 : vector<16x32xf32> to vector<16x32xbf16>
    %c0_43 = arith.constant 0 : index
    %c0_44 = arith.constant 0 : index
    %105 = vector.load %arg4[%c0_43, %c0_44] : memref<32x32xbf16, #tpu.memory_space<vmem>>, vector<32x32xbf16>
    %cst_45 = arith.constant dense<0.000000e+00> : vector<16x32xf32>
    %106 = tpu.matmul %104, %105, %cst_45 {dimension_numbers = #tpu.dot_dimension_numbers<[1], [0], [0], [1], [0, 0, 1, 1], [], []>} : vector<16x32xbf16>, vector<32x32xbf16>, vector<16x32xf32> -> vector<16x32xf32>
    %107 = arith.addf %97, %106 : vector<16x32xf32>
    %c0_46 = arith.constant 0 : index
    %c0_47 = arith.constant 0 : index
    %108 = vector.load %arg5[%c0_46, %c0_47] : memref<1x32xf32, #tpu.memory_space<vmem>>, vector<1x32xf32>
    %109 = vector.broadcast %108 : vector<1x32xf32> to vector<16x32xf32>
    %110 = arith.addf %107, %109 : vector<16x32xf32>
    %c0_48 = arith.constant 0 : index
    %c0_49 = arith.constant 0 : index
    %111 = vector.load %arg6[%c0_48, %c0_49] : memref<16x32xf32, #tpu.memory_space<vmem>>, vector<16x32xf32>
    tpu.vector_store %arg6[%c0_48, %c0_49], %110 {strides = array<i32>} : memref<16x32xf32, #tpu.memory_space<vmem>>, vector<16x32xf32>,
    return
  }
  func.func @transform_0(%arg0: i32, %arg1: i32) -> (i32, i32) {
    %c0_i32 = arith.constant 0 : i32
    %c0_i32_0 = arith.constant 0 : i32
    return %arg1, %c0_i32 : i32, i32
  }
  func.func @transform_1(%arg0: i32, %arg1: i32) -> (i32, i32) {
    %c0_i32 = arith.constant 0 : i32
    %c0_i32_0 = arith.constant 0 : i32
    return %c0_i32, %arg0 : i32, i32
  }
  func.func @transform_2(%arg0: i32, %arg1: i32) -> (i32, i32) {
    %c0_i32 = arith.constant 0 : i32
    %c0_i32_0 = arith.constant 0 : i32
    return %c0_i32, %arg0 : i32, i32
  }
  func.func @transform_3(%arg0: i32, %arg1: i32) -> (i32, i32) {
    %c0_i32 = arith.constant 0 : i32
    %c0_i32_0 = arith.constant 0 : i32
    return %c0_i32, %arg0 : i32, i32
  }
  func.func @transform_4(%arg0: i32, %arg1: i32) -> (i32, i32) {
    %c0_i32 = arith.constant 0 : i32
    return %arg1, %arg0 : i32, i32
  }
}

</mosaic_0001>

<llo_original>
// kernel: kan_forward.1
$region0: #{kan_forward.1}
  #allocation0 [shape = 'u32[]', space=smem, size = 0x4, offset = 0x4, fixed_abs, tag = 'smem constant byte address 0x4 - core index']
  #allocation1 [shape = 'u32[144,128]{1,0:T(1,128)}', space=vmem, size = 0x12000, scoped, tag = 'internal scratch']
  %s0 = inlined_call_operand.vmem [shape: f32[16,32], index: 0, kind: input, shape index: {}]
  %s1 = inlined_call_operand.vmem [shape: bf16[256,32], index: 1, kind: input, shape index: {}]
  %s2 = inlined_call_operand.vmem [shape: bf16[32,32], index: 2, kind: input, shape index: {}]
  %s3 = inlined_call_operand.vmem [shape: f32[1,32], index: 3, kind: input, shape index: {}]
  %s4 = inlined_call_operand.hbm [shape: f32[16,32], index: 4, kind: output, shape index: {}]
  %s5 = sld [smem:[#allocation0]]
  $region26: #{kan_forward.1} parent=0
    _
  %s7 = ssub.s32 1, %s5
  %s8 = scalar_select 0, %s7, %s5
  $region1: #{kan_forward.1} parent=0
    #allocation2 [shape = 'u8[8192]{0}', space=vmem, size = 0x2000, scoped, tag = 'output window, operand 0, single buffered']
    #allocation3 [shape = 's32[1]{0}', space=sflag, size = 0x4, scoped, tag = 'scoped memory for kan_forward.1']
    %9 = vsyncpa [#allocation3], 0
    // Predicated region
    $region2: #{kan_forward.1} parent=1 // pred_check
      _
    $region3: #{kan_forward.1} parent=1 // pred_check_branch
      %11 = sbr.rel (0) target = $region5
    $region4: #{kan_forward.1} parent=1 // pred_region
      _
    $region5: #{kan_forward.1} parent=1 // pred_fallthru
      _
    // Predicated region
    $region6: #{kan_forward.1} parent=1 // pred_check
      _
    $region7: #{kan_forward.1} parent=1 // pred_check_branch
      %13 = sbr.rel (0) target = $region9
    $region8: #{kan_forward.1} parent=1 // pred_region
      _
    $region9: #{kan_forward.1} parent=1 // pred_fallthru
      _
    // Predicated region
    $region10: #{kan_forward.1} parent=1 // pred_check
      _
    $region11: #{kan_forward.1} parent=1 // pred_check_branch
      %15 = sbr.rel (0) target = $region13
    $region12: #{kan_forward.1} parent=1 // pred_region
      _
    $region13: #{kan_forward.1} parent=1 // pred_fallthru
      _
    // Predicated region
    $region14: #{kan_forward.1} parent=1 // pred_check
      _
    $region15: #{kan_forward.1} parent=1 // pred_check_branch
      %17 = sbr.rel (0) target = $region17
    $region16: #{kan_forward.1} parent=1 // pred_region
      _
    $region17: #{kan_forward.1} parent=1 // pred_fallthru
      _
    %v19 = vld [vmem:[%s0] sm:$0xff]
    %v20 = vld [vmem:[%s0 + $0x8] sm:$0xff]
    %v21 = vsub.f32 %v19, -2.0
    %v22 = vsub.f32 %v20, -2.0
    %v23 = vmul.f32 %v21, 1.75
    %v24 = vmul.f32 %v22, 1.75
    %v25 = vmul.f32 %v23, %v23
    %v26 = vmul.f32 %v24, %v24
    %v27 = vsub.f32 0.0, %v25
    %v28 = vsub.f32 0.0, %v26
    %v29 = vmul.f32 %v27, 1.442695
    %v30 = vpow.pop %v29
    %v31 = vmul.f32 %v28, 1.442695
    %v32 = vpow.pop %v31
    %v33 = vpack.c.bf16 %v32, %v30
    %v34 = vsub.f32 %v19, -1.4285715
    %v35 = vsub.f32 %v20, -1.4285715
    %v36 = vmul.f32 %v34, 1.75
    %v37 = vmul.f32 %v35, 1.75
    %v38 = vmul.f32 %v36, %v36
    %v39 = vmul.f32 %v37, %v37
    %v40 = vsub.f32 0.0, %v38
    %v41 = vsub.f32 0.0, %v39
    %v42 = vmul.f32 %v40, 1.442695
    %v43 = vpow.pop %v42
    %v44 = vmul.f32 %v41, 1.442695
    %v45 = vpow.pop %v44
    %v46 = vpack.c.bf16 %v45, %v43
    %v47 = vsub.f32 %v19, -0.85714287
    %v48 = vsub.f32 %v20, -0.85714287
    %v49 = vmul.f32 %v47, 1.75
    %v50 = vmul.f32 %v48, 1.75
    %v51 = vmul.f32 %v49, %v49
    %v52 = vmul.f32 %v50, %v50
    %v53 = vsub.f32 0.0, %v51
    %v54 = vsub.f32 0.0, %v52
    %v55 = vmul.f32 %v53, 1.442695
    %v56 = vpow.pop %v55
    %v57 = vmul.f32 %v54, 1.442695
    %v58 = vpow.pop %v57
    %v59 = vpack.c.bf16 %v58, %v56
    %v60 = vsub.f32 %v19, -0.2857143
    %v61 = vsub.f32 %v20, -0.2857143
    %v62 = vmul.f32 %v60, 1.75
    %v63 = vmul.f32 %v61, 1.75
    %v64 = vmul.f32 %v62, %v62
    %v65 = vmul.f32 %v63, %v63
    %v66 = vsub.f32 0.0, %v64
    %v67 = vsub.f32 0.0, %v65
    %v68 = vmul.f32 %v66, 1.442695
    %v69 = vpow.pop %v68
    %v70 = vmul.f32 %v67, 1.442695
    %v71 = vpow.pop %v70
    %v72 = vpack.c.bf16 %v71, %v69
    %v73 = vsub.f32 %v19, 0.2857143
    %v74 = vsub.f32 %v20, 0.2857143
    %v75 = vmul.f32 %v73, 1.75
    %v76 = vmul.f32 %v74, 1.75
    %v77 = vmul.f32 %v75, %v75
    %v78 = vmul.f32 %v76, %v76
    %v79 = vsub.f32 0.0, %v77
    %v80 = vsub.f32 0.0, %v78
    %v81 = vmul.f32 %v79, 1.442695
    %v82 = vpow.pop %v81
    %v83 = vmul.f32 %v80, 1.442695
    %v84 = vpow.pop %v83
    %v85 = vpack.c.bf16 %v84, %v82
    %v86 = vsub.f32 %v19, 0.85714287
    %v87 = vsub.f32 %v20, 0.85714287
    %v88 = vmul.f32 %v86, 1.75
    %v89 = vmul.f32 %v87, 1.75
    %v90 = vmul.f32 %v88, %v88
    %v91 = vmul.f32 %v89, %v89
    %v92 = vsub.f32 0.0, %v90
    %v93 = vsub.f32 0.0, %v91
    %v94 = vmul.f32 %v92, 1.442695
    %v95 = vpow.pop %v94
    %v96 = vmul.f32 %v93, 1.442695
    %v97 = vpow.pop %v96
    %v98 = vpack.c.bf16 %v97, %v95
    %v99 = vsub.f32 %v19, 1.4285715
    %v100 = vsub.f32 %v20, 1.4285715
    %v101 = vmul.f32 %v99, 1.75
    %v102 = vmul.f32 %v100, 1.75
    %v103 = vmul.f32 %v101, %v101
    %v104 = vmul.f32 %v102, %v102
    %v105 = vsub.f32 0.0, %v103
    %v106 = vsub.f32 0.0, %v104
    %v107 = vmul.f32 %v105, 1.442695
    %v108 = vpow.pop %v107
    %v109 = vmul.f32 %v106, 1.442695
    %v110 = vpow.pop %v109
    %v111 = vpack.c.bf16 %v110, %v108
    %v112 = vsub.f32 %v19, 2.0
    %v113 = vsub.f32 %v20, 2.0
    %v114 = vmul.f32 %v112, 1.75
    %v115 = vmul.f32 %v113, 1.75
    %v116 = vmul.f32 %v114, %v114
    %v117 = vmul.f32 %v115, %v115
    %v118 = vsub.f32 0.0, %v116
    %v119 = vsub.f32 0.0, %v117
    %v120 = vmul.f32 %v118, 1.442695
    %v121 = vpow.pop %v120
    %v122 = vmul.f32 %v119, 1.442695
    %v123 = vpow.pop %v122
    %v124 = vpack.c.bf16 %v123, %v121
    %v125 = vld [vmem:[%s1] sm:$0xf]
    %v126 = vld [vmem:[%s1 + $0x4] sm:$0xf]
    %v127 = vld [vmem:[%s1 + $0x8] sm:$0xf]
    %v128 = vld [vmem:[%s1 + $0xc] sm:$0xf]
    %v129 = vld [vmem:[%s1 + $0x10] sm:$0xf]
    %v130 = vld [vmem:[%s1 + $0x14] sm:$0xf]
    %v131 = vld [vmem:[%s1 + $0x18] sm:$0xf]
    %v132 = vld [vmem:[%s1 + $0x1c] sm:$0xf]
    %v137 = vunpack.c.l.b16 %v129
    %v138 = vunpack.c.l.b16 %v130
    %v139 = vunpack.c.l.b16 %v131
    %v140 = vunpack.c.l.b16 %v132
    %v141 = vpack.c.b16 %v138, %v137
    %v142 = vpack.c.b16 %v140, %v139
    %vm145 = vcmask 261120
    %v147 = vsel %vm145, %v46, 0
    %149 = vmatprep.subr.bf16.mxu0 0
    %150 = vmatpush1.bf16.msra.mxu0 0
    %151 = vmatprep.subr.bf16.mxu0 0
    %152 = vmatpush1.bf16.msra.mxu0 0
    %153 = vmatprep.subr.bf16.mxu0 0
    %154 = vmatpush1.bf16.msra.mxu0 0
    %155 = vmatprep.subr.bf16.mxu0 0
    %156 = vmatpush1.bf16.msra.mxu0 0
    %157 = vmatprep.subr.bf16.mxu0 0
    %158 = vmatpush1.bf16.msra.mxu0 0
    %159 = vmatprep.subr.bf16.mxu0 0
    %160 = vmatpush1.bf16.msra.mxu0 0
    %161 = vmatprep.subr.bf16.mxu0 0
    %162 = vmatpush1.bf16.msra.mxu0 %v142
    %163 = vmatprep.subr.bf16.mxu0 0
    %164 = vmatpush1.bf16.msra.mxu0 %v141
    %165 = vmatprep.subr.bf16.mxu0 0
    %166 = vmatpush2.bf16.msra.mxu0 0
    %167 = vmatprep.subr.bf16.mxu0 0
    %168 = vmatpush2.bf16.msra.mxu0 0
    %169 = vmatprep.subr.bf16.mxu0 0
    %170 = vmatpush2.bf16.msra.mxu0 0
    %171 = vmatprep.subr.bf16.mxu0 0
    %172 = vmatpush2.bf16.msra.mxu0 0
    %173 = vmatprep.subr.bf16.mxu0 0
    %174 = vmatpush2.bf16.msra.mxu0 0
    %175 = vmatprep.subr.bf16.mxu0 0
    %176 = vmatpush2.bf16.msra.mxu0 0
    %177 = vmatprep.subr.bf16.mxu0 0
    %178 = vmatpush2.bf16.msra.mxu0 0
    %179 = vmatprep.subr.bf16.mxu0 0
    %180 = vmatpush2.bf16.msra.mxu0 0
    %181 = vmatprep.mubr.bf16.mxu0 0
    %182 = vmatmul.mubr.bf16.gmra.mxu0 %v147
    %v183 = vpop.f32.mrf.mxu0
    %v184 = vadd.f32 0.0, %v183
    %v185 = vpop.f32.mrf.mxu0
    %v186 = vpop.f32.mrf.mxu0
    %v187 = vadd.f32 0.0, %v186
    %v188 = vpop.f32.mrf.mxu0
    %189 = vdwg.mxu0
    %v194 = vunpack.c.l.b16 %v125
    %v195 = vunpack.c.l.b16 %v126
    %v196 = vunpack.c.l.b16 %v127
    %v197 = vunpack.c.l.b16 %v128
    %v198 = vpack.c.b16 %v195, %v194
    %v199 = vpack.c.b16 %v197, %v196
    %v203 = vsel %vm145, %v33, 0
    %205 = vmatprep.subr.bf16.mxu0 0
    %206 = vmatpush1.bf16.msra.mxu0 0
    %207 = vmatprep.subr.bf16.mxu0 0
    %208 = vmatpush1.bf16.msra.mxu0 0
    %209 = vmatprep.subr.bf16.mxu0 0
    %210 = vmatpush1.bf16.msra.mxu0 0
    %211 = vmatprep.subr.bf16.mxu0 0
    %212 = vmatpush1.bf16.msra.mxu0 0
    %213 = vmatprep.subr.bf16.mxu0 0
    %214 = vmatpush1.bf16.msra.mxu0 0
    %215 = vmatprep.subr.bf16.mxu0 0
    %216 = vmatpush1.bf16.msra.mxu0 0
    %217 = vmatprep.subr.bf16.mxu0 0
    %218 = vmatpush1.bf16.msra.mxu0 %v199
    %219 = vmatprep.subr.bf16.mxu0 0
    %220 = vmatpush1.bf16.msra.mxu0 %v198
    %221 = vmatprep.subr.bf16.mxu0 0
    %222 = vmatpush2.bf16.msra.mxu0 0
    %223 = vmatprep.subr.bf16.mxu0 0
    %224 = vmatpush2.bf16.msra.mxu0 0
    %225 = vmatprep.subr.bf16.mxu0 0
    %226 = vmatpush2.bf16.msra.mxu0 0
    %227 = vmatprep.subr.bf16.mxu0 0
    %228 = vmatpush2.bf16.msra.mxu0 0
    %229 = vmatprep.subr.bf16.mxu0 0
    %230 = vmatpush2.bf16.msra.mxu0 0
    %231 = vmatprep.subr.bf16.mxu0 0
    %232 = vmatpush2.bf16.msra.mxu0 0
    %233 = vmatprep.subr.bf16.mxu0 0
    %234 = vmatpush2.bf16.msra.mxu0 0
    %235 = vmatprep.subr.bf16.mxu0 0
    %236 = vmatpush2.bf16.msra.mxu0 0
    %237 = vmatprep.mubr.bf16.mxu0 0
    %238 = vmatmul.mubr.bf16.gmra.mxu0 %v203
    %v239 = vpop.f32.mrf.mxu0
    %v240 = vadd.f32 %v184, %v239
    %v241 = vpop.f32.mrf.mxu0
    %v242 = vpop.f32.mrf.mxu0
    %v243 = vadd.f32 %v187, %v242
    %v244 = vpop.f32.mrf.mxu0
    %245 = vdwg.mxu0
    %v246 = vld [vmem:[%s1 + $0x20] sm:$0xf]
    %v247 = vld [vmem:[%s1 + $0x24] sm:$0xf]
    %v248 = vld [vmem:[%s1 + $0x28] sm:$0xf]
    %v249 = vld [vmem:[%s1 + $0x2c] sm:$0xf]
    %v254 = vunpack.c.l.b16 %v246
    %v255 = vunpack.c.l.b16 %v247
    %v256 = vunpack.c.l.b16 %v248
    %v257 = vunpack.c.l.b16 %v249
    %v258 = vpack.c.b16 %v255, %v254
    %v259 = vpack.c.b16 %v257, %v256
    %v263 = vsel %vm145, %v59, 0
    %265 = vmatprep.subr.bf16.mxu0 0
    %266 = vmatpush1.bf16.msra.mxu0 0
    %267 = vmatprep.subr.bf16.mxu0 0
    %268 = vmatpush1.bf16.msra.mxu0 0
    %269 = vmatprep.subr.bf16.mxu0 0
    %270 = vmatpush1.bf16.msra.mxu0 0
    %271 = vmatprep.subr.bf16.mxu0 0
    %272 = vmatpush1.bf16.msra.mxu0 0
    %273 = vmatprep.subr.bf16.mxu0 0
    %274 = vmatpush1.bf16.msra.mxu0 0
    %275 = vmatprep.subr.bf16.mxu0 0
    %276 = vmatpush1.bf16.msra.mxu0 0
    %277 = vmatprep.subr.bf16.mxu0 0
    %278 = vmatpush1.bf16.msra.mxu0 %v259
    %279 = vmatprep.subr.bf16.mxu0 0
    %280 = vmatpush1.bf16.msra.mxu0 %v258
    %281 = vmatprep.subr.bf16.mxu0 0
    %282 = vmatpush2.bf16.msra.mxu0 0
    %283 = vmatprep.subr.bf16.mxu0 0
    %284 = vmatpush2.bf16.msra.mxu0 0
    %285 = vmatprep.subr.bf16.mxu0 0
    %286 = vmatpush2.bf16.msra.mxu0 0
    %287 = vmatprep.subr.bf16.mxu0 0
    %288 = vmatpush2.bf16.msra.mxu0 0
    %289 = vmatprep.subr.bf16.mxu0 0
    %290 = vmatpush2.bf16.msra.mxu0 0
    %291 = vmatprep.subr.bf16.mxu0 0
    %292 = vmatpush2.bf16.msra.mxu0 0
    %293 = vmatprep.subr.bf16.mxu0 0
    %294 = vmatpush2.bf16.msra.mxu0 0
    %295 = vmatprep.subr.bf16.mxu0 0
    %296 = vmatpush2.bf16.msra.mxu0 0
    %297 = vmatprep.mubr.bf16.mxu0 0
    %298 = vmatmul.mubr.bf16.gmra.mxu0 %v263
    %v299 = vpop.f32.mrf.mxu0
    %v300 = vadd.f32 0.0, %v299
    %v301 = vpop.f32.mrf.mxu0
    %v302 = vpop.f32.mrf.mxu0
    %v303 = vadd.f32 0.0, %v302
    %v304 = vpop.f32.mrf.mxu0
    %305 = vdwg.mxu0
    %v306 = vadd.f32 %v240, %v300
    %v307 = vadd.f32 %v243, %v303
    %v308 = vld [vmem:[%s1 + $0x30] sm:$0xf]
    %v309 = vld [vmem:[%s1 + $0x34] sm:$0xf]
    %v310 = vld [vmem:[%s1 + $0x38] sm:$0xf]
    %v311 = vld [vmem:[%s1 + $0x3c] sm:$0xf]
    %v316 = vunpack.c.l.b16 %v308
    %v317 = vunpack.c.l.b16 %v309
    %v318 = vunpack.c.l.b16 %v310
    %v319 = vunpack.c.l.b16 %v311
    %v320 = vpack.c.b16 %v317, %v316
    %v321 = vpack.c.b16 %v319, %v318
    %v325 = vsel %vm145, %v72, 0
    %327 = vmatprep.subr.bf16.mxu0 0
    %328 = vmatpush1.bf16.msra.mxu0 0
    %329 = vmatprep.subr.bf16.mxu0 0
    %330 = vmatpush1.bf16.msra.mxu0 0
    %331 = vmatprep.subr.bf16.mxu0 0
    %332 = vmatpush1.bf16.msra.mxu0 0
    %333 = vmatprep.subr.bf16.mxu0 0
    %334 = vmatpush1.bf16.msra.mxu0 0
    %335 = vmatprep.subr.bf16.mxu0 0
    %336 = vmatpush1.bf16.msra.mxu0 0
    %337 = vmatprep.subr.bf16.mxu0 0
    %338 = vmatpush1.bf16.msra.mxu0 0
    %339 = vmatprep.subr.bf16.mxu0 0
    %340 = vmatpush1.bf16.msra.mxu0 %v321
    %341 = vmatprep.subr.bf16.mxu0 0
    %342 = vmatpush1.bf16.msra.mxu0 %v320
    %343 = vmatprep.subr.bf16.mxu0 0
    %344 = vmatpush2.bf16.msra.mxu0 0
    %345 = vmatprep.subr.bf16.mxu0 0
    %346 = vmatpush2.bf16.msra.mxu0 0
    %347 = vmatprep.subr.bf16.mxu0 0
    %348 = vmatpush2.bf16.msra.mxu0 0
    %349 = vmatprep.subr.bf16.mxu0 0
    %350 = vmatpush2.bf16.msra.mxu0 0
    %351 = vmatprep.subr.bf16.mxu0 0
    %352 = vmatpush2.bf16.msra.mxu0 0
    %353 = vmatprep.subr.bf16.mxu0 0
    %354 = vmatpush2.bf16.msra.mxu0 0
    %355 = vmatprep.subr.bf16.mxu0 0
    %356 = vmatpush2.bf16.msra.mxu0 0
    %357 = vmatprep.subr.bf16.mxu0 0
    %358 = vmatpush2.bf16.msra.mxu0 0
    %359 = vmatprep.mubr.bf16.mxu0 0
    %360 = vmatmul.mubr.bf16.gmra.mxu0 %v325
    %v361 = vpop.f32.mrf.mxu0
    %v362 = vadd.f32 0.0, %v361
    %v363 = vpop.f32.mrf.mxu0
    %v364 = vpop.f32.mrf.mxu0
    %v365 = vadd.f32 0.0, %v364
    %v366 = vpop.f32.mrf.mxu0
    %367 = vdwg.mxu0
    %v368 = vadd.f32 %v306, %v362
    %v369 = vadd.f32 %v307, %v365
    %v370 = vld [vmem:[%s1 + $0x40] sm:$0xf]
    %v371 = vld [vmem:[%s1 + $0x44] sm:$0xf]
    %v372 = vld [vmem:[%s1 + $0x48] sm:$0xf]
    %v373 = vld [vmem:[%s1 + $0x4c] sm:$0xf]
    %v378 = vunpack.c.l.b16 %v370
    %v379 = vunpack.c.l.b16 %v371
    %v380 = vunpack.c.l.b16 %v372
    %v381 = vunpack.c.l.b16 %v373
    %v382 = vpack.c.b16 %v379, %v378
    %v383 = vpack.c.b16 %v381, %v380
    %v387 = vsel %vm145, %v85, 0
    %389 = vmatprep.subr.bf16.mxu0 0
    %390 = vmatpush1.bf16.msra.mxu0 0
    %391 = vmatprep.subr.bf16.mxu0 0
    %392 = vmatpush1.bf16.msra.mxu0 0
    %393 = vmatprep.subr.bf16.mxu0 0
    %394 = vmatpush1.bf16.msra.mxu0 0
    %395 = vmatprep.subr.bf16.mxu0 0
    %396 = vmatpush1.bf16.msra.mxu0 0
    %397 = vmatprep.subr.bf16.mxu0 0
    %398 = vmatpush1.bf16.msra.mxu0 0
    %399 = vmatprep.subr.bf16.mxu0 0
    %400 = vmatpush1.bf16.msra.mxu0 0
    %401 = vmatprep.subr.bf16.mxu0 0
    %402 = vmatpush1.bf16.msra.mxu0 %v383
    %403 = vmatprep.subr.bf16.mxu0 0
    %404 = vmatpush1.bf16.msra.mxu0 %v382
    %405 = vmatprep.subr.bf16.mxu0 0
    %406 = vmatpush2.bf16.msra.mxu0 0
    %407 = vmatprep.subr.bf16.mxu0 0
    %408 = vmatpush2.bf16.msra.mxu0 0
    %409 = vmatprep.subr.bf16.mxu0 0
    %410 = vmatpush2.bf16.msra.mxu0 0
    %411 = vmatprep.subr.bf16.mxu0 0
    %412 = vmatpush2.bf16.msra.mxu0 0
    %413 = vmatprep.subr.bf16.mxu0 0
    %414 = vmatpush2.bf16.msra.mxu0 0
    %415 = vmatprep.subr.bf16.mxu0 0
    %416 = vmatpush2.bf16.msra.mxu0 0
    %417 = vmatprep.subr.bf16.mxu0 0
    %418 = vmatpush2.bf16.msra.mxu0 0
    %419 = vmatprep.subr.bf16.mxu0 0
    %420 = vmatpush2.bf16.msra.mxu0 0
    %421 = vmatprep.mubr.bf16.mxu0 0
    %422 = vmatmul.mubr.bf16.gmra.mxu0 %v387
    %v423 = vpop.f32.mrf.mxu0
    %v424 = vadd.f32 0.0, %v423
    %v425 = vpop.f32.mrf.mxu0
    %v426 = vpop.f32.mrf.mxu0
    %v427 = vadd.f32 0.0, %v426
    %v428 = vpop.f32.mrf.mxu0
    %429 = vdwg.mxu0
    %v430 = vadd.f32 %v368, %v424
    %v431 = vadd.f32 %v369, %v427
    %v432 = vld [vmem:[%s1 + $0x50] sm:$0xf]
    %v433 = vld [vmem:[%s1 + $0x54] sm:$0xf]
    %v434 = vld [vmem:[%s1 + $0x58] sm:$0xf]
    %v435 = vld [vmem:[%s1 + $0x5c] sm:$0xf]
    %v440 = vunpack.c.l.b16 %v432
    %v441 = vunpack.c.l.b16 %v433
    %v442 = vunpack.c.l.b16 %v434
    %v443 = vunpack.c.l.b16 %v435
    %v444 = vpack.c.b16 %v441, %v440
    %v445 = vpack.c.b16 %v443, %v442
    %v449 = vsel %vm145, %v98, 0
    %451 = vmatprep.subr.bf16.mxu0 0
    %452 = vmatpush1.bf16.msra.mxu0 0
    %453 = vmatprep.subr.bf16.mxu0 0
    %454 = vmatpush1.bf16.msra.mxu0 0
    %455 = vmatprep.subr.bf16.mxu0 0
    %456 = vmatpush1.bf16.msra.mxu0 0
    %457 = vmatprep.subr.bf16.mxu0 0
    %458 = vmatpush1.bf16.msra.mxu0 0
    %459 = vmatprep.subr.bf16.mxu0 0
    %460 = vmatpush1.bf16.msra.mxu0 0
    %461 = vmatprep.subr.bf16.mxu0 0
    %462 = vmatpush1.bf16.msra.mxu0 0
    %463 = vmatprep.subr.bf16.mxu0 0
    %464 = vmatpush1.bf16.msra.mxu0 %v445
    %465 = vmatprep.subr.bf16.mxu0 0
    %466 = vmatpush1.bf16.msra.mxu0 %v444
    %467 = vmatprep.subr.bf16.mxu0 0
    %468 = vmatpush2.bf16.msra.mxu0 0
    %469 = vmatprep.subr.bf16.mxu0 0
    %470 = vmatpush2.bf16.msra.mxu0 0
    %471 = vmatprep.subr.bf16.mxu0 0
    %472 = vmatpush2.bf16.msra.mxu0 0
    %473 = vmatprep.subr.bf16.mxu0 0
    %474 = vmatpush2.bf16.msra.mxu0 0
    %475 = vmatprep.subr.bf16.mxu0 0
    %476 = vmatpush2.bf16.msra.mxu0 0
    %477 = vmatprep.subr.bf16.mxu0 0
    %478 = vmatpush2.bf16.msra.mxu0 0
    %479 = vmatprep.subr.bf16.mxu0 0
    %480 = vmatpush2.bf16.msra.mxu0 0
    %481 = vmatprep.subr.bf16.mxu0 0
    %482 = vmatpush2.bf16.msra.mxu0 0
    %483 = vmatprep.mubr.bf16.mxu0 0
    %484 = vmatmul.mubr.bf16.gmra.mxu0 %v449
    %v485 = vpop.f32.mrf.mxu0
    %v486 = vadd.f32 0.0, %v485
    %v487 = vpop.f32.mrf.mxu0
    %v488 = vpop.f32.mrf.mxu0
    %v489 = vadd.f32 0.0, %v488
    %v490 = vpop.f32.mrf.mxu0
    %491 = vdwg.mxu0
    %v492 = vadd.f32 %v430, %v486
    %v493 = vadd.f32 %v431, %v489
    %v494 = vld [vmem:[%s1 + $0x60] sm:$0xf]
    %v495 = vld [vmem:[%s1 + $0x64] sm:$0xf]
    %v496 = vld [vmem:[%s1 + $0x68] sm:$0xf]
    %v497 = vld [vmem:[%s1 + $0x6c] sm:$0xf]
    %v502 = vunpack.c.l.b16 %v494
    %v503 = vunpack.c.l.b16 %v495
    %v504 = vunpack.c.l.b16 %v496
    %v505 = vunpack.c.l.b16 %v497
    %v506 = vpack.c.b16 %v503, %v502
    %v507 = vpack.c.b16 %v505, %v504
    %v511 = vsel %vm145, %v111, 0
    %513 = vmatprep.subr.bf16.mxu0 0
    %514 = vmatpush1.bf16.msra.mxu0 0
    %515 = vmatprep.subr.bf16.mxu0 0
    %516 = vmatpush1.bf16.msra.mxu0 0
    %517 = vmatprep.subr.bf16.mxu0 0
    %518 = vmatpush1.bf16.msra.mxu0 0
    %519 = vmatprep.subr.bf16.mxu0 0
    %520 = vmatpush1.bf16.msra.mxu0 0
    %521 = vmatprep.subr.bf16.mxu0 0
    %522 = vmatpush1.bf16.msra.mxu0 0
    %523 = vmatprep.subr.bf16.mxu0 0
    %524 = vmatpush1.bf16.msra.mxu0 0
    %525 = vmatprep.subr.bf16.mxu0 0
    %526 = vmatpush1.bf16.msra.mxu0 %v507
    %527 = vmatprep.subr.bf16.mxu0 0
    %528 = vmatpush1.bf16.msra.mxu0 %v506
    %529 = vmatprep.subr.bf16.mxu0 0
    %530 = vmatpush2.bf16.msra.mxu0 0
    %531 = vmatprep.subr.bf16.mxu0 0
    %532 = vmatpush2.bf16.msra.mxu0 0
    %533 = vmatprep.subr.bf16.mxu0 0
    %534 = vmatpush2.bf16.msra.mxu0 0
    %535 = vmatprep.subr.bf16.mxu0 0
    %536 = vmatpush2.bf16.msra.mxu0 0
    %537 = vmatprep.subr.bf16.mxu0 0
    %538 = vmatpush2.bf16.msra.mxu0 0
    %539 = vmatprep.subr.bf16.mxu0 0
    %540 = vmatpush2.bf16.msra.mxu0 0
    %541 = vmatprep.subr.bf16.mxu0 0
    %542 = vmatpush2.bf16.msra.mxu0 0
    %543 = vmatprep.subr.bf16.mxu0 0
    %544 = vmatpush2.bf16.msra.mxu0 0
    %545 = vmatprep.mubr.bf16.mxu0 0
    %546 = vmatmul.mubr.bf16.gmra.mxu0 %v511
    %v547 = vpop.f32.mrf.mxu0
    %v548 = vadd.f32 0.0, %v547
    %v549 = vpop.f32.mrf.mxu0
    %v550 = vpop.f32.mrf.mxu0
    %v551 = vadd.f32 0.0, %v550
    %v552 = vpop.f32.mrf.mxu0
    %553 = vdwg.mxu0
    %v554 = vadd.f32 %v492, %v548
    %v555 = vadd.f32 %v493, %v551
    %v556 = vld [vmem:[%s1 + $0x70] sm:$0xf]
    %v557 = vld [vmem:[%s1 + $0x74] sm:$0xf]
    %v558 = vld [vmem:[%s1 + $0x78] sm:$0xf]
    %v559 = vld [vmem:[%s1 + $0x7c] sm:$0xf]
    %v564 = vunpack.c.l.b16 %v556
    %v565 = vunpack.c.l.b16 %v557
    %v566 = vunpack.c.l.b16 %v558
    %v567 = vunpack.c.l.b16 %v559
    %v568 = vpack.c.b16 %v565, %v564
    %v569 = vpack.c.b16 %v567, %v566
    %v573 = vsel %vm145, %v124, 0
    %575 = vmatprep.subr.bf16.mxu0 0
    %576 = vmatpush1.bf16.msra.mxu0 0
    %577 = vmatprep.subr.bf16.mxu0 0
    %578 = vmatpush1.bf16.msra.mxu0 0
    %579 = vmatprep.subr.bf16.mxu0 0
    %580 = vmatpush1.bf16.msra.mxu0 0
    %581 = vmatprep.subr.bf16.mxu0 0
    %582 = vmatpush1.bf16.msra.mxu0 0
    %583 = vmatprep.subr.bf16.mxu0 0
    %584 = vmatpush1.bf16.msra.mxu0 0
    %585 = vmatprep.subr.bf16.mxu0 0
    %586 = vmatpush1.bf16.msra.mxu0 0
    %587 = vmatprep.subr.bf16.mxu0 0
    %588 = vmatpush1.bf16.msra.mxu0 %v569
    %589 = vmatprep.subr.bf16.mxu0 0
    %590 = vmatpush1.bf16.msra.mxu0 %v568
    %591 = vmatprep.subr.bf16.mxu0 0
    %592 = vmatpush2.bf16.msra.mxu0 0
    %593 = vmatprep.subr.bf16.mxu0 0
    %594 = vmatpush2.bf16.msra.mxu0 0
    %595 = vmatprep.subr.bf16.mxu0 0
    %596 = vmatpush2.bf16.msra.mxu0 0
    %597 = vmatprep.subr.bf16.mxu0 0
    %598 = vmatpush2.bf16.msra.mxu0 0
    %599 = vmatprep.subr.bf16.mxu0 0
    %600 = vmatpush2.bf16.msra.mxu0 0
    %601 = vmatprep.subr.bf16.mxu0 0
    %602 = vmatpush2.bf16.msra.mxu0 0
    %603 = vmatprep.subr.bf16.mxu0 0
    %604 = vmatpush2.bf16.msra.mxu0 0
    %605 = vmatprep.subr.bf16.mxu0 0
    %606 = vmatpush2.bf16.msra.mxu0 0
    %607 = vmatprep.mubr.bf16.mxu0 0
    %608 = vmatmul.mubr.bf16.gmra.mxu0 %v573
    %v609 = vpop.f32.mrf.mxu0
    %v610 = vadd.f32 0.0, %v609
    %v611 = vpop.f32.mrf.mxu0
    %v612 = vpop.f32.mrf.mxu0
    %v613 = vadd.f32 0.0, %v612
    %v614 = vpop.f32.mrf.mxu0
    %615 = vdwg.mxu0
    %v616 = vadd.f32 %v554, %v610
    %v617 = vadd.f32 %v555, %v613
    %v618 = vxor.u32 %v19, 2147483648
    %v619 = vxor.u32 %v20, 2147483648
    %v620 = vmul.f32 %v618, 1.442695
    %v621 = vpow.pop %v620
    %v622 = vmul.f32 %v619, 1.442695
    %v623 = vpow.pop %v622
    %v624 = vadd.f32 %v621, 1.0
    %v625 = vadd.f32 %v623, 1.0
    %v626 = vrcp.pop %v624
    %v627 = vmul.f32 1.0, %v626
    %v628 = vrcp.pop %v625
    %v629 = vmul.f32 1.0, %v628
    %v630 = vmul.f32 %v19, %v627
    %v631 = vmul.f32 %v20, %v629
    %v632 = vpack.c.bf16 %v631, %v630
    %v633 = vld [vmem:[%s2] sm:$0xf]
    %v634 = vld [vmem:[%s2 + $0x4] sm:$0xf]
    %v635 = vld [vmem:[%s2 + $0x8] sm:$0xf]
    %v636 = vld [vmem:[%s2 + $0xc] sm:$0xf]
    %v641 = vunpack.c.l.b16 %v633
    %v642 = vunpack.c.l.b16 %v634
    %v643 = vunpack.c.l.b16 %v635
    %v644 = vunpack.c.l.b16 %v636
    %v645 = vpack.c.b16 %v642, %v641
    %v646 = vpack.c.b16 %v644, %v643
    %v650 = vsel %vm145, %v632, 0
    %652 = vmatprep.subr.bf16.mxu0 0
    %653 = vmatpush1.bf16.msra.mxu0 0
    %654 = vmatprep.subr.bf16.mxu0 0
    %655 = vmatpush1.bf16.msra.mxu0 0
    %656 = vmatprep.subr.bf16.mxu0 0
    %657 = vmatpush1.bf16.msra.mxu0 0
    %658 = vmatprep.subr.bf16.mxu0 0
    %659 = vmatpush1.bf16.msra.mxu0 0
    %660 = vmatprep.subr.bf16.mxu0 0
    %661 = vmatpush1.bf16.msra.mxu0 0
    %662 = vmatprep.subr.bf16.mxu0 0
    %663 = vmatpush1.bf16.msra.mxu0 0
    %664 = vmatprep.subr.bf16.mxu0 0
    %665 = vmatpush1.bf16.msra.mxu0 %v646
    %666 = vmatprep.subr.bf16.mxu0 0
    %667 = vmatpush1.bf16.msra.mxu0 %v645
    %668 = vmatprep.subr.bf16.mxu0 0
    %669 = vmatpush2.bf16.msra.mxu0 0
    %670 = vmatprep.subr.bf16.mxu0 0
    %671 = vmatpush2.bf16.msra.mxu0 0
    %672 = vmatprep.subr.bf16.mxu0 0
    %673 = vmatpush2.bf16.msra.mxu0 0
    %674 = vmatprep.subr.bf16.mxu0 0
    %675 = vmatpush2.bf16.msra.mxu0 0
    %676 = vmatprep.subr.bf16.mxu0 0
    %677 = vmatpush2.bf16.msra.mxu0 0
    %678 = vmatprep.subr.bf16.mxu0 0
    %679 = vmatpush2.bf16.msra.mxu0 0
    %680 = vmatprep.subr.bf16.mxu0 0
    %681 = vmatpush2.bf16.msra.mxu0 0
    %682 = vmatprep.subr.bf16.mxu0 0
    %683 = vmatpush2.bf16.msra.mxu0 0
    %684 = vmatprep.mubr.bf16.mxu0 0
    %685 = vmatmul.mubr.bf16.gmra.mxu0 %v650
    %v686 = vpop.f32.mrf.mxu0
    %v687 = vadd.f32 0.0, %v686
    %v688 = vpop.f32.mrf.mxu0
    %v689 = vpop.f32.mrf.mxu0
    %v690 = vadd.f32 0.0, %v689
    %v691 = vpop.f32.mrf.mxu0
    %692 = vdwg.mxu0
    %v693 = vadd.f32 %v616, %v687
    %v694 = vadd.f32 %v617, %v690
    %v695 = vld [vmem:[%s3] sm:$0x1]
    %v697 = vlaneseq
    %v698 = vshrl.u32 %v697, 7
    %v699 = vsub.s32 0, %v698
    %v700 = vrot.slane %v695, %v699
    %v702 = vadd.f32 %v693, %v700
    %v703 = vadd.f32 %v694, %v700
    %704 = vst.msk [vmem:[#allocation2] sm:$0xff] %vm145, %v702
    %705 = vst.msk [vmem:[#allocation2 + $0x8] sm:$0xff] %vm145, %v703
    // Predicated region
    $region18: #{kan_forward.1} parent=1 // pred_check
      _
    $region19: #{kan_forward.1} parent=1 // pred_check_branch
      %707 = sbr.rel (0) target = $region21
    $region20: #{kan_forward.1} parent=1 // pred_region
      %s709 = ssub.s32 256, 256
      %710 = vsyncadd [#allocation3], %s709
      %s711 = sshll.u32 [#allocation2], 4
      %s712 = int_to_ptr.vmem [resolvable:$true] %s711
      %717 = dma.vmem_to_hbm [thread:$0]  %s712, 256, %s4, [#allocation3], 128, 128, 8
    $region21: #{kan_forward.1} parent=1 // pred_fallthru
      _
    // Predicated region
    $region22: #{kan_forward.1} parent=1 // pred_check
      _
    $region23: #{kan_forward.1} parent=1 // pred_check_branch
      %719 = sbr.rel (0) target = $region25
    $region24: #{kan_forward.1} parent=1 // pred_region
      %720 = dma.done [#allocation3], 256
    $region25: #{kan_forward.1} parent=1 // pred_fallthru
      _
    %721 = vsyncpa [#allocation3], 1

</llo_original>
